<compile_context>
chip_gen: v7x
topology: tpu7x:2x2x1
jax: 0.10.0
libtpu: 0.0.40
codegen_flags: <defaults>
</compile_context>

<pallas_src>
import jax
import jax.numpy as jnp
from jax import lax
from jax.experimental import pallas as pl
from jax.experimental.pallas import tpu as pltpu

EPS = 1e-5
_CACHE_BUDGET_BYTES = 24 << 20   # persistent h1 cache cap (v7x 64 MiB safe)
_VMEM_LIMIT_CAP = 56 << 20       # scoped-VMEM request cap (below v7x physical)


def _round_up(n, m):
    return ((n + m - 1) // m) * m


def _make_stroke_kernel(batch, tile_b, needs_mask, use_cache):
    """Build the kernel for (true batch, tile size, ragged last tile?, cache?)."""
    inv_b = 1.0 / float(batch)

    def body(x_ref, w1_ref, w2_ref, w3t_ref, gb_ref, b3_ref, o_ref,
             s1s_ref, s1q_ref, s2s_ref, s2q_ref, h1c_ref):
        p = pl.program_id(0)   # phase: 0 = L1 stats, 1 = L2 stats, 2 = output
        i = pl.program_id(1)   # batch tile

        # Zero the stat accumulators once, at the very first grid step.
        @pl.when(jnp.logical_and(p == 0, i == 0))
        def _():
            s1s_ref[...] = jnp.zeros_like(s1s_ref)
            s1q_ref[...] = jnp.zeros_like(s1q_ref)
            s2s_ref[...] = jnp.zeros_like(s2s_ref)
            s2q_ref[...] = jnp.zeros_like(s2q_ref)

        if needs_mask:
            row = i * tile_b + lax.broadcasted_iota(jnp.int32, (tile_b, 1), 0)
            valid = row < batch

        def mask_rows(h):
            # Padded rows of the ragged last tile contain garbage -> exclude
            # them from the batch statistics (select, so NaNs cannot leak).
            return jnp.where(valid, h, 0.0) if needs_mask else h

        def compute_h1():
            x = x_ref[...].astype(jnp.float32)
            return jnp.dot(x, w1_ref[...], preferred_element_type=jnp.float32)

        def load_h1():
            return h1c_ref[i] if use_cache else compute_h1()

        def bn_relu(h, s_sum, s_sq, g, be):
            # Folded BN: h_n = max(h * scale + shift, 0)
            mean = s_sum * inv_b
            var = jnp.maximum(s_sq * inv_b - mean * mean, 0.0)
            scale = g * lax.rsqrt(var + EPS)
            shift = be - mean * scale
            return jnp.maximum(h * scale + shift, 0.0)

        # ---- Phase 0: h1 = x @ W1, cache, accumulate layer-1 stats ----
        @pl.when(p == 0)
        def _():
            h1 = compute_h1()                       # (TILE_B, 64)
            if use_cache:
                h1c_ref[i] = h1
            h1m = mask_rows(h1)
            s1s_ref[...] += jnp.sum(h1m, axis=0, keepdims=True)
            s1q_ref[...] += jnp.sum(h1m * h1m, axis=0, keepdims=True)
            o_ref[...] = jnp.zeros_like(o_ref)      # no garbage writeback

        # ---- Phase 1: BN1+ReLU, h2 = . @ W2, accumulate layer-2 stats ----
        @pl.when(p == 1)
        def _():
            h1n = bn_relu(load_h1(), s1s_ref[...], s1q_ref[...],
                          gb_ref[0:1, 0:64], gb_ref[1:2, 0:64])
            # TODO(synk): ActivationDropout treated as identity.
            h2 = jnp.dot(h1n, w2_ref[...],
                         preferred_element_type=jnp.float32)   # (TILE_B, 32)
            h2m = mask_rows(h2)
            s2s_ref[...] += jnp.sum(h2m, axis=0, keepdims=True)
            s2q_ref[...] += jnp.sum(h2m * h2m, axis=0, keepdims=True)
            o_ref[...] = jnp.zeros_like(o_ref)

        # ---- Phase 2: BN2+ReLU + Linear(32,1), lane-dense writeback ----
        @pl.when(p == 2)
        def _():
            h1n = bn_relu(load_h1(), s1s_ref[...], s1q_ref[...],
                          gb_ref[0:1, 0:64], gb_ref[1:2, 0:64])
            h2 = jnp.dot(h1n, w2_ref[...],
                         preferred_element_type=jnp.float32)
            h2n = bn_relu(h2, s2s_ref[...], s2q_ref[...],
                          gb_ref[2:3, 0:32], gb_ref[3:4, 0:32])
            # (1,32) x (TILE_B,32) contracting both feature axes -> (1, TILE_B)
            # batch lands on the lane axis: unmasked, lane-dense store.
            out = lax.dot_general(
                w3t_ref[...], h2n,
                dimension_numbers=(((1,), (1,)), ((), ())),
                preferred_element_type=jnp.float32)
            o_ref[...] = (out + b3_ref[...]).astype(o_ref.dtype)

    if use_cache:
        def kernel(x_ref, w1_ref, w2_ref, w3t_ref, gb_ref, b3_ref, o_ref,
                   s1s, s1q, s2s, s2q, h1c):
            body(x_ref, w1_ref, w2_ref, w3t_ref, gb_ref, b3_ref, o_ref,
                 s1s, s1q, s2s, s2q, h1c)
    else:
        def kernel(x_ref, w1_ref, w2_ref, w3t_ref, gb_ref, b3_ref, o_ref,
                   s1s, s1q, s2s, s2q):
            body(x_ref, w1_ref, w2_ref, w3t_ref, gb_ref, b3_ref, o_ref,
                 s1s, s1q, s2s, s2q, None)
    return kernel


def stroke_model_forward(x, params, *, tile_b=None, force_streaming=False):
    """x: (B, input_dim) float32. Returns (B,) float32 (matches .squeeze(1))."""
    B, D = x.shape
    x = x.astype(jnp.float32)   # no-op if already f32

    if tile_b is None:
        # Target ~2 MiB of x per tile to amortize per-grid-step overhead.
        tile_b = max(512, min(8192, (2 << 20) // max(1, 4 * D)))

    if B <= tile_b:
        TILE_B = B                       # single tile: full-array block dims
        num_tiles = 1
    else:
        TILE_B = _round_up(min(tile_b, B), 128)   # lane-dense output blocks
        num_tiles = -(-B // TILE_B)
    B_pad = num_tiles * TILE_B
    needs_mask = (B_pad != B)

    # h1 cache: (num_tiles, TILE_B, 64) f32; 64-lane slab is layout-padded to
    # 128 lanes -> account 512 B per cached row.
    cache_bytes = B_pad * 128 * 4
    use_cache = (not force_streaming) and (cache_bytes <= _CACHE_BUDGET_BYTES)

    vmem_needed = (
        (cache_bytes if use_cache else 0)
        + 2 * TILE_B * D * 4              # x tile, double buffered
        + 2 * TILE_B * 4                  # output tile, double buffered
        + 2 * (D * 64 + 64 * 32 + 4 * 128 + 32 + 1) * 4   # resident weights
        + 4 * 8 * 128 * 4                 # stat accumulators (padded)
    )
    vmem_limit = int(min(_VMEM_LIMIT_CAP, max(32 << 20, vmem_needed + (8 << 20))))

    # Pack the small per-feature vectors into a single (4,128) tile:
    #   row 0: gamma1[0:64]  row 1: beta1[0:64]
    #   row 2: gamma2[0:32]  row 3: beta2[0:32]
    gb = jnp.zeros((4, 128), jnp.float32)
    gb = gb.at[0, :64].set(params["g1"].reshape(64))
    gb = gb.at[1, :64].set(params["be1"].reshape(64))
    gb = gb.at[2, :32].set(params["g2"].reshape(32))
    gb = gb.at[3, :32].set(params["be2"].reshape(32))

    w1 = params["w1"].astype(jnp.float32)                    # (D, 64)
    w2 = params["w2"].astype(jnp.float32)                    # (64, 32)
    w3t = params["w3"].reshape(1, 32).astype(jnp.float32)    # (1, 32) = w3^T
    b3 = params["b3"].reshape(1, 1).astype(jnp.float32)      # (1, 1)

    kernel = _make_stroke_kernel(B, TILE_B, needs_mask, use_cache)

    if use_cache:
        # x only needed in phase 0; collapse to block 0 afterwards so the
        # pipeline stops re-streaming it from HBM.
        x_map = lambda p, i: (jnp.where(p == 0, i, 0), 0)
    else:
        x_map = lambda p, i: (i, 0)

    scratch_shapes = [
        pltpu.VMEM((1, 64), jnp.float32),   # layer-1 sum
        pltpu.VMEM((1, 64), jnp.float32),   # layer-1 sum of squares
        pltpu.VMEM((1, 32), jnp.float32),   # layer-2 sum
        pltpu.VMEM((1, 32), jnp.float32),   # layer-2 sum of squares
    ]
    if use_cache:
        scratch_shapes.append(pltpu.VMEM((num_tiles, TILE_B, 64), jnp.float32))

    out = pl.pallas_call(
        kernel,
        out_shape=jax.ShapeDtypeStruct((1, B), jnp.float32),
        grid_spec=pltpu.PrefetchScalarGridSpec(
            num_scalar_prefetch=0,
            grid=(3, num_tiles),                              # (phase, tile)
            in_specs=[
                pl.BlockSpec((TILE_B, D), x_map),             # x: streamed once
                pl.BlockSpec((D, 64), lambda p, i: (0, 0)),   # W1: resident
                pl.BlockSpec((64, 32), lambda p, i: (0, 0)),  # W2: resident
                pl.BlockSpec((1, 32), lambda p, i: (0, 0)),   # W3^T: resident
                pl.BlockSpec((4, 128), lambda p, i: (0, 0)),  # packed gamma/beta
                pl.BlockSpec((1, 1), lambda p, i: (0, 0)),    # b3
            ],
            out_specs=pl.BlockSpec((1, TILE_B), lambda p, i: (0, i)),
            scratch_shapes=scratch_shapes,
        ),
        compiler_params=pltpu.CompilerParams(
            # Both axes must stay 'arbitrary': the batch axis feeds the shared
            # cross-tile BN accumulators and the phase axis is sequential.
            # TODO(synk): v7x dual-core split would need per-core partial
            # stats + a cross-core reduction.
            dimension_semantics=("arbitrary", "arbitrary"),
            vmem_limit_bytes=vmem_limit,
        ),
    )(x, w1, w2, w3t, gb, b3)

    return out[0]   # (B,)  == .squeeze(1)


def init_params(key, input_dim):
    ks = jax.random.split(key, 6)
    s1 = 1.0 / jnp.sqrt(float(input_dim))
    s2 = 1.0 / jnp.sqrt(64.0)
    s3 = 1.0 / jnp.sqrt(32.0)
    return {
        # Linear(input_dim, 64), stored (in, out). b1/b2 only used by the
        # reference (they cancel under batch-stat BN, kernel drops them).
        "w1": jax.random.uniform(ks[0], (input_dim, 64), jnp.float32, -s1, s1),
        "b1": jax.random.uniform(ks[1], (1, 64), jnp.float32, -s1, s1),
        "g1": jnp.ones((1, 64), jnp.float32),
        "be1": jnp.zeros((1, 64), jnp.float32),
        # Linear(64, 32)
        "w2": jax.random.uniform(ks[2], (64, 32), jnp.float32, -s2, s2),
        "b2": jax.random.uniform(ks[3], (1, 32), jnp.float32, -s2, s2),
        "g2": jnp.ones((1, 32), jnp.float32),
        "be2": jnp.zeros((1, 32), jnp.float32),
        # Linear(32, 1)
        "w3": jax.random.uniform(ks[4], (32, 1), jnp.float32, -s3, s3),
        "b3": jax.random.uniform(ks[5], (1, 1), jnp.float32, -s3, s3),
    }


def _reference_forward(x, p):
    """Pure-JAX reference with the exact PyTorch (train-mode BN) semantics."""
    h = x @ p["w1"] + p["b1"]
    m = h.mean(0, keepdims=True)
    v = ((h - m) ** 2).mean(0, keepdims=True)
    h = (h - m) / jnp.sqrt(v + EPS) * p["g1"] + p["be1"]
    h = jnp.maximum(h, 0.0)
    h = h @ p["w2"] + p["b2"]
    m = h.mean(0, keepdims=True)
    v = ((h - m) ** 2).mean(0, keepdims=True)
    h = (h - m) / jnp.sqrt(v + EPS) * p["g2"] + p["be2"]
    h = jnp.maximum(h, 0.0)
    out = h @ p["w3"] + p["b3"]
    return out[:, 0]


if __name__ == "__main__":
    key = jax.random.PRNGKey(0)
    kx, kp, kx2 = jax.random.split(key, 3)

    # Primary check: small batch, single tile, h1 cache path.
    B, INPUT_DIM = 8, 16
    x = jax.random.normal(kx, (B, INPUT_DIM), jnp.float32)
    params = init_params(kp, INPUT_DIM)

    y = stroke_model_forward(x, params)
    jax.block_until_ready(y)
    y_ref = _reference_forward(x, params)
    assert y.shape == (B,)
    assert jnp.allclose(y, y_ref, atol=5e-4, rtol=5e-4), (
        float(jnp.max(jnp.abs(y - y_ref))))

    # Secondary check: multi-tile + ragged last tile exercises the cross-tile
    # BN accumulation, in-kernel masking, h1 cache and lane-dense writeback.
    B2 = 300
    x2 = jax.random.normal(kx2, (B2, INPUT_DIM), jnp.float32)
    y2 = stroke_model_forward(x2, params, tile_b=128)
    jax.block_until_ready(y2)
    y2_ref = _reference_forward(x2, params)
    assert y2.shape == (B2,)
    assert jnp.allclose(y2, y2_ref, atol=5e-4, rtol=5e-4), (
        float(jnp.max(jnp.abs(y2 - y2_ref))))

    # Tertiary check: streaming fallback path (cache disabled) stays correct.
    y3 = stroke_model_forward(x2, params, tile_b=128, force_streaming=True)
    jax.block_until_ready(y3)
    assert jnp.allclose(y3, y2_ref, atol=5e-4, rtol=5e-4), (
        float(jnp.max(jnp.abs(y3 - y2_ref))))

    print("KERNEL_OK")
</pallas_src>

<mosaic_0001>
module attributes {stable_mosaic.version = 11 : i64} {
  func.func @kernel(%arg0: i32, %arg1: i32, %arg2: memref<8x16xf32, #tpu.memory_space<vmem>>, %arg3: memref<16x64xf32, #tpu.memory_space<vmem>>, %arg4: memref<64x32xf32, #tpu.memory_space<vmem>>, %arg5: memref<1x32xf32, #tpu.memory_space<vmem>>, %arg6: memref<4x128xf32, #tpu.memory_space<vmem>>, %arg7: memref<1x1xf32, #tpu.memory_space<vmem>>, %arg8: memref<1x8xf32, #tpu.memory_space<vmem>>, %arg9: memref<1x64xf32, #tpu.memory_space<vmem>>, %arg10: memref<1x64xf32, #tpu.memory_space<vmem>>, %arg11: memref<1x32xf32, #tpu.memory_space<vmem>>, %arg12: memref<1x32xf32, #tpu.memory_space<vmem>>, %arg13: memref<1x8x64xf32, #tpu.memory_space<vmem>>) attributes {dimension_semantics = [#tpu.dimension_semantics<arbitrary>, #tpu.dimension_semantics<arbitrary>], iteration_bounds = array<i64: 3, 1>, scalar_prefetch = 0 : i64, scratch_operands = 5 : i64, tpu.core_type = #tpu.core_type<tc>, window_params = [{transform_indices = @transform_0, window_bounds = array<i64: 8, 16>}, {pipeline_mode = #tpu.pipeline_mode<synchronous>, transform_indices = @transform_1, window_bounds = array<i64: 16, 64>}, {pipeline_mode = #tpu.pipeline_mode<synchronous>, transform_indices = @transform_2, window_bounds = array<i64: 64, 32>}, {pipeline_mode = #tpu.pipeline_mode<synchronous>, transform_indices = @transform_3, window_bounds = array<i64: 1, 32>}, {pipeline_mode = #tpu.pipeline_mode<synchronous>, transform_indices = @transform_4, window_bounds = array<i64: 4, 128>}, {pipeline_mode = #tpu.pipeline_mode<synchronous>, transform_indices = @transform_5, window_bounds = array<i64: 1, 1>}, {transform_indices = @transform_6, window_bounds = array<i64: 1, 8>}]} {
    %c0_i32 = arith.constant 0 : i32
    %0 = arith.cmpi eq, %arg0, %c0_i32 : i32
    %c0_i32_0 = arith.constant 0 : i32
    %1 = arith.cmpi eq, %arg1, %c0_i32_0 : i32
    %2 = arith.andi %0, %1 : i1
    %3 = arith.extui %2 : i1 to i32
    %c0_i32_1 = arith.constant 0 : i32
    %4 = arith.cmpi ne, %3, %c0_i32_1 : i32
    scf.if %4 {
      %cst = arith.constant 0.000000e+00 : f32
      %14 = vector.broadcast %cst : f32 to vector<1x64xf32>
      %c0 = arith.constant 0 : index
      %c0_6 = arith.constant 0 : index
      %15 = vector.load %arg9[%c0, %c0_6] : memref<1x64xf32, #tpu.memory_space<vmem>>, vector<1x64xf32>
      tpu.vector_store %arg9[%c0, %c0_6], %14 {strides = array<i32>} : memref<1x64xf32, #tpu.memory_space<vmem>>, vector<1x64xf32>,
      %cst_7 = arith.constant 0.000000e+00 : f32
      %16 = vector.broadcast %cst_7 : f32 to vector<1x64xf32>
      %c0_8 = arith.constant 0 : index
      %c0_9 = arith.constant 0 : index
      %17 = vector.load %arg10[%c0_8, %c0_9] : memref<1x64xf32, #tpu.memory_space<vmem>>, vector<1x64xf32>
      tpu.vector_store %arg10[%c0_8, %c0_9], %16 {strides = array<i32>} : memref<1x64xf32, #tpu.memory_space<vmem>>, vector<1x64xf32>,
      %cst_10 = arith.constant 0.000000e+00 : f32
      %18 = vector.broadcast %cst_10 : f32 to vector<1x32xf32>
      %c0_11 = arith.constant 0 : index
      %c0_12 = arith.constant 0 : index
      %19 = vector.load %arg11[%c0_11, %c0_12] : memref<1x32xf32, #tpu.memory_space<vmem>>, vector<1x32xf32>
      tpu.vector_store %arg11[%c0_11, %c0_12], %18 {strides = array<i32>} : memref<1x32xf32, #tpu.memory_space<vmem>>, vector<1x32xf32>,
      %cst_13 = arith.constant 0.000000e+00 : f32
      %20 = vector.broadcast %cst_13 : f32 to vector<1x32xf32>
      %c0_14 = arith.constant 0 : index
      %c0_15 = arith.constant 0 : index
      %21 = vector.load %arg12[%c0_14, %c0_15] : memref<1x32xf32, #tpu.memory_space<vmem>>, vector<1x32xf32>
      tpu.vector_store %arg12[%c0_14, %c0_15], %20 {strides = array<i32>} : memref<1x32xf32, #tpu.memory_space<vmem>>, vector<1x32xf32>,
    } else {
    }
    %c0_i32_2 = arith.constant 0 : i32
    %5 = arith.cmpi eq, %arg0, %c0_i32_2 : i32
    %6 = arith.extui %5 : i1 to i32
    %c0_i32_3 = arith.constant 0 : i32
    %7 = arith.cmpi ne, %6, %c0_i32_3 : i32
    scf.if %7 {
      %c0 = arith.constant 0 : index
      %c0_6 = arith.constant 0 : index
      %14 = vector.load %arg2[%c0, %c0_6] : memref<8x16xf32, #tpu.memory_space<vmem>>, vector<8x16xf32>
      %c0_7 = arith.constant 0 : index
      %c0_8 = arith.constant 0 : index
      %15 = vector.load %arg3[%c0_7, %c0_8] : memref<16x64xf32, #tpu.memory_space<vmem>>, vector<16x64xf32>
      %cst = arith.constant dense<0.000000e+00> : vector<8x64xf32>
      %16 = tpu.matmul %14, %15, %cst {dimension_numbers = #tpu.dot_dimension_numbers<[1], [0], [0], [1], [0, 0, 1, 1], [], []>} : vector<8x16xf32>, vector<16x64xf32>, vector<8x64xf32> -> vector<8x64xf32>
      %17 = arith.index_cast %arg1 : i32 to index
      %c0_9 = arith.constant 0 : index
      %c0_10 = arith.constant 0 : index
      %18 = vector.load %arg13[%17, %c0_9, %c0_10] : memref<1x8x64xf32, #tpu.memory_space<vmem>>, vector<1x8x64xf32>
      %19 = vector.shape_cast %18 : vector<1x8x64xf32> to vector<8x64xf32>
      %20 = vector.shape_cast %16 : vector<8x64xf32> to vector<1x8x64xf32>
      tpu.vector_store %arg13[%17, %c0_9, %c0_10], %20 {strides = array<i32>} : memref<1x8x64xf32, #tpu.memory_space<vmem>>, vector<1x8x64xf32>,
      %c0_11 = arith.constant 0 : index
      %c0_12 = arith.constant 0 : index
      %21 = vector.load %arg9[%c0_11, %c0_12] : memref<1x64xf32, #tpu.memory_space<vmem>>, vector<1x64xf32>
      %cst_13 = arith.constant dense<0.000000e+00> : vector<64xf32>
      %22 = vector.multi_reduction <add>, %16, %cst_13 [0] : vector<8x64xf32> to vector<64xf32>
      %23 = vector.shape_cast %22 : vector<64xf32> to vector<1x64xf32>
      %24 = arith.addf %21, %23 : vector<1x64xf32>
      %c0_14 = arith.constant 0 : index
      %c0_15 = arith.constant 0 : index
      %25 = vector.load %arg9[%c0_14, %c0_15] : memref<1x64xf32, #tpu.memory_space<vmem>>, vector<1x64xf32>
      tpu.vector_store %arg9[%c0_14, %c0_15], %24 {strides = array<i32>} : memref<1x64xf32, #tpu.memory_space<vmem>>, vector<1x64xf32>,
      %c0_16 = arith.constant 0 : index
      %c0_17 = arith.constant 0 : index
      %26 = vector.load %arg10[%c0_16, %c0_17] : memref<1x64xf32, #tpu.memory_space<vmem>>, vector<1x64xf32>
      %27 = arith.mulf %16, %16 : vector<8x64xf32>
      %cst_18 = arith.constant dense<0.000000e+00> : vector<64xf32>
      %28 = vector.multi_reduction <add>, %27, %cst_18 [0] : vector<8x64xf32> to vector<64xf32>
      %29 = vector.shape_cast %28 : vector<64xf32> to vector<1x64xf32>
      %30 = arith.addf %26, %29 : vector<1x64xf32>
      %c0_19 = arith.constant 0 : index
      %c0_20 = arith.constant 0 : index
      %31 = vector.load %arg10[%c0_19, %c0_20] : memref<1x64xf32, #tpu.memory_space<vmem>>, vector<1x64xf32>
      tpu.vector_store %arg10[%c0_19, %c0_20], %30 {strides = array<i32>} : memref<1x64xf32, #tpu.memory_space<vmem>>, vector<1x64xf32>,
      %cst_21 = arith.constant 0.000000e+00 : f32
      %32 = vector.broadcast %cst_21 : f32 to vector<1x8xf32>
      %c0_22 = arith.constant 0 : index
      %c0_23 = arith.constant 0 : index
      %33 = vector.load %arg8[%c0_22, %c0_23] : memref<1x8xf32, #tpu.memory_space<vmem>>, vector<1x8xf32>
      tpu.vector_store %arg8[%c0_22, %c0_23], %32 {strides = array<i32>} : memref<1x8xf32, #tpu.memory_space<vmem>>, vector<1x8xf32>,
    } else {
    }
    %c1_i32 = arith.constant 1 : i32
    %8 = arith.cmpi eq, %arg0, %c1_i32 : i32
    %9 = arith.extui %8 : i1 to i32
    %c0_i32_4 = arith.constant 0 : i32
    %10 = arith.cmpi ne, %9, %c0_i32_4 : i32
    scf.if %10 {
      %14 = arith.index_cast %arg1 : i32 to index
      %c0 = arith.constant 0 : index
      %c0_6 = arith.constant 0 : index
      %15 = vector.load %arg13[%14, %c0, %c0_6] : memref<1x8x64xf32, #tpu.memory_space<vmem>>, vector<1x8x64xf32>
      %16 = vector.shape_cast %15 : vector<1x8x64xf32> to vector<8x64xf32>
      %c0_7 = arith.constant 0 : index
      %c0_8 = arith.constant 0 : index
      %17 = vector.load %arg9[%c0_7, %c0_8] : memref<1x64xf32, #tpu.memory_space<vmem>>, vector<1x64xf32>
      %c0_9 = arith.constant 0 : index
      %c0_10 = arith.constant 0 : index
      %18 = vector.load %arg10[%c0_9, %c0_10] : memref<1x64xf32, #tpu.memory_space<vmem>>, vector<1x64xf32>
      %c0_11 = arith.constant 0 : index
      %c0_12 = arith.constant 0 : index
      %19 = vector.load %arg6[%c0_11, %c0_12] : memref<4x128xf32, #tpu.memory_space<vmem>>, vector<1x64xf32>
      %c1 = arith.constant 1 : index
      %c0_13 = arith.constant 0 : index
      %20 = vector.load %arg6[%c1, %c0_13] : memref<4x128xf32, #tpu.memory_space<vmem>>, vector<1x64xf32>
      %cst = arith.constant 1.250000e-01 : f32
      %21 = vector.broadcast %cst : f32 to vector<1x64xf32>
      %22 = arith.mulf %17, %21 : vector<1x64xf32>
      %cst_14 = arith.constant 1.250000e-01 : f32
      %23 = vector.broadcast %cst_14 : f32 to vector<1x64xf32>
      %24 = arith.mulf %18, %23 : vector<1x64xf32>
      %25 = arith.mulf %22, %22 : vector<1x64xf32>
      %26 = arith.subf %24, %25 : vector<1x64xf32>
      %cst_15 = arith.constant 0.000000e+00 : f32
      %27 = vector.broadcast %cst_15 : f32 to vector<1x64xf32>
      %28 = arith.maximumf %26, %27 : vector<1x64xf32>
      %cst_16 = arith.constant 9.99999974E-6 : f32
      %29 = vector.broadcast %cst_16 : f32 to vector<1x64xf32>
      %30 = arith.addf %28, %29 : vector<1x64xf32>
      %31 = math.rsqrt %30 : vector<1x64xf32>
      %32 = arith.mulf %19, %31 : vector<1x64xf32>
      %33 = arith.mulf %22, %32 : vector<1x64xf32>
      %34 = arith.subf %20, %33 : vector<1x64xf32>
      %35 = vector.broadcast %32 : vector<1x64xf32> to vector<8x64xf32>
      %36 = arith.mulf %16, %35 : vector<8x64xf32>
      %37 = vector.broadcast %34 : vector<1x64xf32> to vector<8x64xf32>
      %38 = arith.addf %36, %37 : vector<8x64xf32>
      %cst_17 = arith.constant 0.000000e+00 : f32
      %39 = vector.broadcast %cst_17 : f32 to vector<8x64xf32>
      %40 = arith.maximumf %38, %39 : vector<8x64xf32>
      %c0_18 = arith.constant 0 : index
      %c0_19 = arith.constant 0 : index
      %41 = vector.load %arg4[%c0_18, %c0_19] : memref<64x32xf32, #tpu.memory_space<vmem>>, vector<64x32xf32>
      %cst_20 = arith.constant dense<0.000000e+00> : vector<8x32xf32>
      %42 = tpu.matmul %40, %41, %cst_20 {dimension_numbers = #tpu.dot_dimension_numbers<[1], [0], [0], [1], [0, 0, 1, 1], [], []>} : vector<8x64xf32>, vector<64x32xf32>, vector<8x32xf32> -> vector<8x32xf32>
      %c0_21 = arith.constant 0 : index
      %c0_22 = arith.constant 0 : index
      %43 = vector.load %arg11[%c0_21, %c0_22] : memref<1x32xf32, #tpu.memory_space<vmem>>, vector<1x32xf32>
      %cst_23 = arith.constant dense<0.000000e+00> : vector<32xf32>
      %44 = vector.multi_reduction <add>, %42, %cst_23 [0] : vector<8x32xf32> to vector<32xf32>
      %45 = vector.shape_cast %44 : vector<32xf32> to vector<1x32xf32>
      %46 = arith.addf %43, %45 : vector<1x32xf32>
      %c0_24 = arith.constant 0 : index
      %c0_25 = arith.constant 0 : index
      %47 = vector.load %arg11[%c0_24, %c0_25] : memref<1x32xf32, #tpu.memory_space<vmem>>, vector<1x32xf32>
      tpu.vector_store %arg11[%c0_24, %c0_25], %46 {strides = array<i32>} : memref<1x32xf32, #tpu.memory_space<vmem>>, vector<1x32xf32>,
      %c0_26 = arith.constant 0 : index
      %c0_27 = arith.constant 0 : index
      %48 = vector.load %arg12[%c0_26, %c0_27] : memref<1x32xf32, #tpu.memory_space<vmem>>, vector<1x32xf32>
      %49 = arith.mulf %42, %42 : vector<8x32xf32>
      %cst_28 = arith.constant dense<0.000000e+00> : vector<32xf32>
      %50 = vector.multi_reduction <add>, %49, %cst_28 [0] : vector<8x32xf32> to vector<32xf32>
      %51 = vector.shape_cast %50 : vector<32xf32> to vector<1x32xf32>
      %52 = arith.addf %48, %51 : vector<1x32xf32>
      %c0_29 = arith.constant 0 : index
      %c0_30 = arith.constant 0 : index
      %53 = vector.load %arg12[%c0_29, %c0_30] : memref<1x32xf32, #tpu.memory_space<vmem>>, vector<1x32xf32>
      tpu.vector_store %arg12[%c0_29, %c0_30], %52 {strides = array<i32>} : memref<1x32xf32, #tpu.memory_space<vmem>>, vector<1x32xf32>,
      %cst_31 = arith.constant 0.000000e+00 : f32
      %54 = vector.broadcast %cst_31 : f32 to vector<1x8xf32>
      %c0_32 = arith.constant 0 : index
      %c0_33 = arith.constant 0 : index
      %55 = vector.load %arg8[%c0_32, %c0_33] : memref<1x8xf32, #tpu.memory_space<vmem>>, vector<1x8xf32>
      tpu.vector_store %arg8[%c0_32, %c0_33], %54 {strides = array<i32>} : memref<1x8xf32, #tpu.memory_space<vmem>>, vector<1x8xf32>,
    } else {
    }
    %c2_i32 = arith.constant 2 : i32
    %11 = arith.cmpi eq, %arg0, %c2_i32 : i32
    %12 = arith.extui %11 : i1 to i32
    %c0_i32_5 = arith.constant 0 : i32
    %13 = arith.cmpi ne, %12, %c0_i32_5 : i32
    scf.if %13 {
      %14 = arith.index_cast %arg1 : i32 to index
      %c0 = arith.constant 0 : index
      %c0_6 = arith.constant 0 : index
      %15 = vector.load %arg13[%14, %c0, %c0_6] : memref<1x8x64xf32, #tpu.memory_space<vmem>>, vector<1x8x64xf32>
      %16 = vector.shape_cast %15 : vector<1x8x64xf32> to vector<8x64xf32>
      %c0_7 = arith.constant 0 : index
      %c0_8 = arith.constant 0 : index
      %17 = vector.load %arg9[%c0_7, %c0_8] : memref<1x64xf32, #tpu.memory_space<vmem>>, vector<1x64xf32>
      %c0_9 = arith.constant 0 : index
      %c0_10 = arith.constant 0 : index
      %18 = vector.load %arg10[%c0_9, %c0_10] : memref<1x64xf32, #tpu.memory_space<vmem>>, vector<1x64xf32>
      %c0_11 = arith.constant 0 : index
      %c0_12 = arith.constant 0 : index
      %19 = vector.load %arg6[%c0_11, %c0_12] : memref<4x128xf32, #tpu.memory_space<vmem>>, vector<1x64xf32>
      %c1 = arith.constant 1 : index
      %c0_13 = arith.constant 0 : index
      %20 = vector.load %arg6[%c1, %c0_13] : memref<4x128xf32, #tpu.memory_space<vmem>>, vector<1x64xf32>
      %cst = arith.constant 1.250000e-01 : f32
      %21 = vector.broadcast %cst : f32 to vector<1x64xf32>
      %22 = arith.mulf %17, %21 : vector<1x64xf32>
      %cst_14 = arith.constant 1.250000e-01 : f32
      %23 = vector.broadcast %cst_14 : f32 to vector<1x64xf32>
      %24 = arith.mulf %18, %23 : vector<1x64xf32>
      %25 = arith.mulf %22, %22 : vector<1x64xf32>
      %26 = arith.subf %24, %25 : vector<1x64xf32>
      %cst_15 = arith.constant 0.000000e+00 : f32
      %27 = vector.broadcast %cst_15 : f32 to vector<1x64xf32>
      %28 = arith.maximumf %26, %27 : vector<1x64xf32>
      %cst_16 = arith.constant 9.99999974E-6 : f32
      %29 = vector.broadcast %cst_16 : f32 to vector<1x64xf32>
      %30 = arith.addf %28, %29 : vector<1x64xf32>
      %31 = math.rsqrt %30 : vector<1x64xf32>
      %32 = arith.mulf %19, %31 : vector<1x64xf32>
      %33 = arith.mulf %22, %32 : vector<1x64xf32>
      %34 = arith.subf %20, %33 : vector<1x64xf32>
      %35 = vector.broadcast %32 : vector<1x64xf32> to vector<8x64xf32>
      %36 = arith.mulf %16, %35 : vector<8x64xf32>
      %37 = vector.broadcast %34 : vector<1x64xf32> to vector<8x64xf32>
      %38 = arith.addf %36, %37 : vector<8x64xf32>
      %cst_17 = arith.constant 0.000000e+00 : f32
      %39 = vector.broadcast %cst_17 : f32 to vector<8x64xf32>
      %40 = arith.maximumf %38, %39 : vector<8x64xf32>
      %c0_18 = arith.constant 0 : index
      %c0_19 = arith.constant 0 : index
      %41 = vector.load %arg4[%c0_18, %c0_19] : memref<64x32xf32, #tpu.memory_space<vmem>>, vector<64x32xf32>
      %cst_20 = arith.constant dense<0.000000e+00> : vector<8x32xf32>
      %42 = tpu.matmul %40, %41, %cst_20 {dimension_numbers = #tpu.dot_dimension_numbers<[1], [0], [0], [1], [0, 0, 1, 1], [], []>} : vector<8x64xf32>, vector<64x32xf32>, vector<8x32xf32> -> vector<8x32xf32>
      %c0_21 = arith.constant 0 : index
      %c0_22 = arith.constant 0 : index
      %43 = vector.load %arg11[%c0_21, %c0_22] : memref<1x32xf32, #tpu.memory_space<vmem>>, vector<1x32xf32>
      %c0_23 = arith.constant 0 : index
      %c0_24 = arith.constant 0 : index
      %44 = vector.load %arg12[%c0_23, %c0_24] : memref<1x32xf32, #tpu.memory_space<vmem>>, vector<1x32xf32>
      %c2 = arith.constant 2 : index
      %c0_25 = arith.constant 0 : index
      %45 = vector.load %arg6[%c2, %c0_25] : memref<4x128xf32, #tpu.memory_space<vmem>>, vector<1x32xf32>
      %c3 = arith.constant 3 : index
      %c0_26 = arith.constant 0 : index
      %46 = vector.load %arg6[%c3, %c0_26] : memref<4x128xf32, #tpu.memory_space<vmem>>, vector<1x32xf32>
      %cst_27 = arith.constant 1.250000e-01 : f32
      %47 = vector.broadcast %cst_27 : f32 to vector<1x32xf32>
      %48 = arith.mulf %43, %47 : vector<1x32xf32>
      %cst_28 = arith.constant 1.250000e-01 : f32
      %49 = vector.broadcast %cst_28 : f32 to vector<1x32xf32>
      %50 = arith.mulf %44, %49 : vector<1x32xf32>
      %51 = arith.mulf %48, %48 : vector<1x32xf32>
      %52 = arith.subf %50, %51 : vector<1x32xf32>
      %cst_29 = arith.constant 0.000000e+00 : f32
      %53 = vector.broadcast %cst_29 : f32 to vector<1x32xf32>
      %54 = arith.maximumf %52, %53 : vector<1x32xf32>
      %cst_30 = arith.constant 9.99999974E-6 : f32
      %55 = vector.broadcast %cst_30 : f32 to vector<1x32xf32>
      %56 = arith.addf %54, %55 : vector<1x32xf32>
      %57 = math.rsqrt %56 : vector<1x32xf32>
      %58 = arith.mulf %45, %57 : vector<1x32xf32>
      %59 = arith.mulf %48, %58 : vector<1x32xf32>
      %60 = arith.subf %46, %59 : vector<1x32xf32>
      %61 = vector.broadcast %58 : vector<1x32xf32> to vector<8x32xf32>
      %62 = arith.mulf %42, %61 : vector<8x32xf32>
      %63 = vector.broadcast %60 : vector<1x32xf32> to vector<8x32xf32>
      %64 = arith.addf %62, %63 : vector<8x32xf32>
      %cst_31 = arith.constant 0.000000e+00 : f32
      %65 = vector.broadcast %cst_31 : f32 to vector<8x32xf32>
      %66 = arith.maximumf %64, %65 : vector<8x32xf32>
      %c0_32 = arith.constant 0 : index
      %c0_33 = arith.constant 0 : index
      %67 = vector.load %arg5[%c0_32, %c0_33] : memref<1x32xf32, #tpu.memory_space<vmem>>, vector<1x32xf32>
      %cst_34 = arith.constant dense<0.000000e+00> : vector<1x8xf32>
      %68 = tpu.matmul %67, %66, %cst_34 {dimension_numbers = #tpu.dot_dimension_numbers<[1], [1], [0], [0], [0, 0, 1, 0], [], []>} : vector<1x32xf32>, vector<8x32xf32>, vector<1x8xf32> -> vector<1x8xf32>
      %c0_35 = arith.constant 0 : index
      %c0_36 = arith.constant 0 : index
      %69 = vector.load %arg7[%c0_35, %c0_36] : memref<1x1xf32, #tpu.memory_space<vmem>>, vector<1x1xf32>
      %70 = vector.broadcast %69 : vector<1x1xf32> to vector<1x8xf32>
      %71 = arith.addf %68, %70 : vector<1x8xf32>
      %c0_37 = arith.constant 0 : index
      %c0_38 = arith.constant 0 : index
      %72 = vector.load %arg8[%c0_37, %c0_38] : memref<1x8xf32, #tpu.memory_space<vmem>>, vector<1x8xf32>
      tpu.vector_store %arg8[%c0_37, %c0_38], %71 {strides = array<i32>} : memref<1x8xf32, #tpu.memory_space<vmem>>, vector<1x8xf32>,
    } else {
    }
    return
  }
  func.func @transform_0(%arg0: i32, %arg1: i32) -> (i32, i32) {
    %c0_i32 = arith.constant 0 : i32
    %0 = arith.cmpi eq, %arg0, %c0_i32 : i32
    %c0_i32_0 = arith.constant 0 : i32
    %1 = arith.select %0, %arg1, %c0_i32_0 : i32
    %c0_i32_1 = arith.constant 0 : i32
    %c0_i32_2 = arith.constant 0 : i32
    return %1, %c0_i32_1 : i32, i32
  }
  func.func @transform_1(%arg0: i32, %arg1: i32) -> (i32, i32) {
    %c0_i32 = arith.constant 0 : i32
    %c0_i32_0 = arith.constant 0 : i32
    %c0_i32_1 = arith.constant 0 : i32
    return %c0_i32, %c0_i32_0 : i32, i32
  }
  func.func @transform_2(%arg0: i32, %arg1: i32) -> (i32, i32) {
    %c0_i32 = arith.constant 0 : i32
    %c0_i32_0 = arith.constant 0 : i32
    %c0_i32_1 = arith.constant 0 : i32
    return %c0_i32, %c0_i32_0 : i32, i32
  }
  func.func @transform_3(%arg0: i32, %arg1: i32) -> (i32, i32) {
    %c0_i32 = arith.constant 0 : i32
    %c0_i32_0 = arith.constant 0 : i32
    %c0_i32_1 = arith.constant 0 : i32
    return %c0_i32, %c0_i32_0 : i32, i32
  }
  func.func @transform_4(%arg0: i32, %arg1: i32) -> (i32, i32) {
    %c0_i32 = arith.constant 0 : i32
    %c0_i32_0 = arith.constant 0 : i32
    %c0_i32_1 = arith.constant 0 : i32
    return %c0_i32, %c0_i32_0 : i32, i32
  }
  func.func @transform_5(%arg0: i32, %arg1: i32) -> (i32, i32) {
    %c0_i32 = arith.constant 0 : i32
    %c0_i32_0 = arith.constant 0 : i32
    %c0_i32_1 = arith.constant 0 : i32
    return %c0_i32, %c0_i32_0 : i32, i32
  }
  func.func @transform_6(%arg0: i32, %arg1: i32) -> (i32, i32) {
    %c0_i32 = arith.constant 0 : i32
    %c0_i32_0 = arith.constant 0 : i32
    return %c0_i32, %arg1 : i32, i32
  }
}

</mosaic_0001>

<llo_original>
// kernel: tpu_custom_call.1
$region0: #{tpu_custom_call.1}
  #allocation0 [shape = 'u32[]', space=smem, size = 0x4, offset = 0x4, fixed_abs, tag = 'smem constant byte address 0x4 - core index']
  #allocation1 [shape = 'u32[144,128]{1,0:T(1,128)}', space=vmem, size = 0x12000, scoped, tag = 'internal scratch']
  #allocation2 [shape = 'f32[1,64]{1,0:T(1,128)}', space=vmem, size = 0x200, scoped, tag = 'scratch operand']
  #allocation3 [shape = 'f32[1,64]{1,0:T(1,128)}', space=vmem, size = 0x200, scoped, tag = 'scratch operand']
  #allocation4 [shape = 'f32[1,32]{1,0:T(1,128)}', space=vmem, size = 0x200, scoped, tag = 'scratch operand']
  #allocation5 [shape = 'f32[1,32]{1,0:T(1,128)}', space=vmem, size = 0x200, scoped, tag = 'scratch operand']
  #allocation6 [shape = 'f32[1,8,64]{2,1,0:T(8,128)}', space=vmem, size = 0x1000, scoped, tag = 'scratch operand']
  #allocation7 [shape = 'f32[1,1]{1,0:T(1,128)S(1)}', space=vmem, size = 0x200, scoped, tag = 'scoped memory for tpu_custom_call.1']
  %s0 = inlined_call_operand.vmem [shape: f32[8,16], index: 0, kind: input, shape index: {}]
  %s1 = inlined_call_operand.vmem [shape: f32[16,64], index: 1, kind: input, shape index: {}]
  %s2 = inlined_call_operand.vmem [shape: f32[64,32], index: 2, kind: input, shape index: {}]
  %s3 = inlined_call_operand.vmem [shape: f32[1,32], index: 3, kind: input, shape index: {}]
  %s4 = inlined_call_operand.vmem [shape: f32[4,128], index: 4, kind: input, shape index: {}]
  %s5 = inlined_call_operand.<no memory space> [shape: f32[1,1], index: 5, kind: input, shape index: {}]
  %s6 = inlined_call_operand.hbm [shape: f32[1,8], index: 6, kind: output, shape index: {}]
  %s7 = sld [smem:[#allocation0]]
  $region73: #{tpu_custom_call.1} parent=0
    _
  %s9 = ssub.s32 1, %s7
  %s10 = scalar_select 0, %s9, %s7
  %v11 = vstv %s5
  %12 = vst [vmem:[#allocation7] sm:$0x1] %v11
  $region1: #{tpu_custom_call.1} parent=0
    #allocation8 [shape = 'u8[512]{0}', space=vmem, size = 0x400, scoped, tag = 'output window, operand 0, single buffered']
    #allocation9 [shape = 's32[2]{0}', space=sflag, size = 0x8, scoped, tag = 'scoped memory for tpu_custom_call.1']
    %13 = vsyncpa [#allocation9], 0
    loop: start=0, step=1, limit=5
    $region2: #{tpu_custom_call.1} parent=1 // loop_pre_header
      _
    $region3: #{tpu_custom_call.1} parent=1 // loop_header
      %s15 = sphi 0, %s19
      %p16 = scmp.ge.s32.totalorder %s15, 5
      %s22 = sphi 0, %s34
      %s23 = sphi 0, %s30
      %s24 = sphi 0, %s22
      %s25 = sphi 0, %s23
      %s26 = sphi 0, %s24
      %s27 = sphi 0, %s25
      %s41 = sphi 0, %s43
      %s44 = sphi 0, %s41
      %s45 = sphi 0, %s44
      %s61 = sphi 0, %s45
      %s65 = sphi 0, %s65
      %s67 = sphi 0, %s65
      %s68 = sphi 0, %s67
      %s82 = sphi 0, %s68
      %s86 = sphi 0, %s86
      %s88 = sphi 0, %s86
      %s89 = sphi 0, %s88
      %s103 = sphi 0, %s89
      %s107 = sphi 0, %s107
      %s109 = sphi 0, %s107
      %s110 = sphi 0, %s109
      %s124 = sphi 0, %s110
      %s128 = sphi 0, %s128
      %s130 = sphi 0, %s128
      %s131 = sphi 0, %s130
      %s145 = sphi 0, %s131
      %s149 = sphi 0, %s149
      %s151 = sphi 0, %s149
      %s152 = sphi 0, %s151
      %s166 = sphi 0, %s152
      %s172 = sphi 0, %s174
      %s175 = sphi 0, %s172
      %s176 = sphi 0, %s175
      %s192 = sphi 0, %s176
    $region4: #{tpu_custom_call.1} parent=1 // loop_header_branch
      %18 = sbr.rel (%p16) target = $region8
    $region5: #{tpu_custom_call.1} parent=1 // loop_body
      %s20 = ssub.s32 %s15, 1
      %s21 = ssub.s32 %s15, 2
      %s28 = sadd.s32 1, %s23
      %p29 = scmp.ge.s32.totalorder %s28, 1
      %s30 = scalar_select %p29, 0, %s28
      %s31 = sadd.s32 1, %s22
      %s32 = scalar_select %p29, %s31, %s22
      %p33 = scmp.ge.s32.totalorder %s32, 3
      %s34 = scalar_select %p33, 0, %s32
      %p35 = scmp.eq.s32.totalorder %s22, 0
      %s36 = scalar_select %p35, %s23, 0
      %p37 = scmp.eq.s32.totalorder %s34, 0
      %s38 = scalar_select %p37, %s30, 0
      %s39 = ssub.s32 %s36, %s38
      %p40 = scmp.eq.s32.totalorder %s39, 0
      %s42 = sadd.s32 %s41, 1
      %s43 = scalar_select %p40, %s41, %s42
      %p46 = pneg %p40
      %p47 = scmp.eq.s32.totalorder %s15, 2
      %p48 = por %p46, %p47
      %p49 = scmp.ne.s32.totalorder %s41, %s44
      %p50 = scmp.eq.s32.totalorder %s15, 0
      %p51 = por %p49, %p50
      %p52 = scmp.ne.s32.totalorder %s41, %s44
      %p53 = scmp.eq.s32.totalorder %s20, 2
      %p54 = por %p52, %p53
      %p55 = scmp.ne.s32.totalorder %s44, %s45
      %p56 = scmp.eq.s32.totalorder %s20, 0
      %p57 = por %p55, %p56
      %p58 = scmp.ne.s32.totalorder %s44, %s45
      %p59 = scmp.eq.s32.totalorder %s21, 2
      %p60 = por %p58, %p59
      %p62 = scmp.ne.s32.totalorder %s45, %s61
      %p63 = scmp.eq.s32.totalorder %s21, 0
      %p64 = por %p62, %p63
      %s66 = sadd.s32 %s65, 1
      %p69 = scmp.eq.s32.totalorder %s15, 2
      %p70 = scmp.ne.s32.totalorder %s65, %s67
      %p71 = scmp.eq.s32.totalorder %s15, 0
      %p72 = por %p70, %p71
      %p73 = scmp.ne.s32.totalorder %s65, %s67
      %p74 = scmp.eq.s32.totalorder %s20, 2
      %p75 = por %p73, %p74
      %p76 = scmp.ne.s32.totalorder %s67, %s68
      %p77 = scmp.eq.s32.totalorder %s20, 0
      %p78 = por %p76, %p77
      %p79 = scmp.ne.s32.totalorder %s67, %s68
      %p80 = scmp.eq.s32.totalorder %s21, 2
      %p81 = por %p79, %p80
      %p83 = scmp.ne.s32.totalorder %s68, %s82
      %p84 = scmp.eq.s32.totalorder %s21, 0
      %p85 = por %p83, %p84
      %s87 = sadd.s32 %s86, 1
      %p90 = scmp.eq.s32.totalorder %s15, 2
      %p91 = scmp.ne.s32.totalorder %s86, %s88
      %p92 = scmp.eq.s32.totalorder %s15, 0
      %p93 = por %p91, %p92
      %p94 = scmp.ne.s32.totalorder %s86, %s88
      %p95 = scmp.eq.s32.totalorder %s20, 2
      %p96 = por %p94, %p95
      %p97 = scmp.ne.s32.totalorder %s88, %s89
      %p98 = scmp.eq.s32.totalorder %s20, 0
      %p99 = por %p97, %p98
      %p100 = scmp.ne.s32.totalorder %s88, %s89
      %p101 = scmp.eq.s32.totalorder %s21, 2
      %p102 = por %p100, %p101
      %p104 = scmp.ne.s32.totalorder %s89, %s103
      %p105 = scmp.eq.s32.totalorder %s21, 0
      %p106 = por %p104, %p105
      %s108 = sadd.s32 %s107, 1
      %p111 = scmp.eq.s32.totalorder %s15, 2
      %p112 = scmp.ne.s32.totalorder %s107, %s109
      %p113 = scmp.eq.s32.totalorder %s15, 0
      %p114 = por %p112, %p113
      %p115 = scmp.ne.s32.totalorder %s107, %s109
      %p116 = scmp.eq.s32.totalorder %s20, 2
      %p117 = por %p115, %p116
      %p118 = scmp.ne.s32.totalorder %s109, %s110
      %p119 = scmp.eq.s32.totalorder %s20, 0
      %p120 = por %p118, %p119
      %p121 = scmp.ne.s32.totalorder %s109, %s110
      %p122 = scmp.eq.s32.totalorder %s21, 2
      %p123 = por %p121, %p122
      %p125 = scmp.ne.s32.totalorder %s110, %s124
      %p126 = scmp.eq.s32.totalorder %s21, 0
      %p127 = por %p125, %p126
      %s129 = sadd.s32 %s128, 1
      %p132 = scmp.eq.s32.totalorder %s15, 2
      %p133 = scmp.ne.s32.totalorder %s128, %s130
      %p134 = scmp.eq.s32.totalorder %s15, 0
      %p135 = por %p133, %p134
      %p136 = scmp.ne.s32.totalorder %s128, %s130
      %p137 = scmp.eq.s32.totalorder %s20, 2
      %p138 = por %p136, %p137
      %p139 = scmp.ne.s32.totalorder %s130, %s131
      %p140 = scmp.eq.s32.totalorder %s20, 0
      %p141 = por %p139, %p140
      %p142 = scmp.ne.s32.totalorder %s130, %s131
      %p143 = scmp.eq.s32.totalorder %s21, 2
      %p144 = por %p142, %p143
      %p146 = scmp.ne.s32.totalorder %s131, %s145
      %p147 = scmp.eq.s32.totalorder %s21, 0
      %p148 = por %p146, %p147
      %s150 = sadd.s32 %s149, 1
      %p153 = scmp.eq.s32.totalorder %s15, 2
      %p154 = scmp.ne.s32.totalorder %s149, %s151
      %p155 = scmp.eq.s32.totalorder %s15, 0
      %p156 = por %p154, %p155
      %p157 = scmp.ne.s32.totalorder %s149, %s151
      %p158 = scmp.eq.s32.totalorder %s20, 2
      %p159 = por %p157, %p158
      %p160 = scmp.ne.s32.totalorder %s151, %s152
      %p161 = scmp.eq.s32.totalorder %s20, 0
      %p162 = por %p160, %p161
      %p163 = scmp.ne.s32.totalorder %s151, %s152
      %p164 = scmp.eq.s32.totalorder %s21, 2
      %p165 = por %p163, %p164
      %p167 = scmp.ne.s32.totalorder %s152, %s166
      %p168 = scmp.eq.s32.totalorder %s21, 0
      %p169 = por %p167, %p168
      %s170 = ssub.s32 %s23, %s30
      %p171 = scmp.eq.s32.totalorder %s170, 0
      %s173 = sadd.s32 %s172, 1
      %s174 = scalar_select %p171, %s172, %s173
      %p177 = pneg %p171
      %p178 = scmp.eq.s32.totalorder %s15, 2
      %p179 = por %p177, %p178
      %p180 = scmp.ne.s32.totalorder %s172, %s175
      %p181 = scmp.eq.s32.totalorder %s15, 0
      %p182 = por %p180, %p181
      %p183 = scmp.ne.s32.totalorder %s172, %s175
      %p184 = scmp.eq.s32.totalorder %s20, 2
      %p185 = por %p183, %p184
      %p186 = scmp.ne.s32.totalorder %s175, %s176
      %p187 = scmp.eq.s32.totalorder %s20, 0
      %p188 = por %p186, %p187
      %p189 = scmp.ne.s32.totalorder %s175, %s176
      %p190 = scmp.eq.s32.totalorder %s21, 2
      %p191 = por %p189, %p190
      %p193 = scmp.ne.s32.totalorder %s176, %s192
      %p194 = scmp.eq.s32.totalorder %s21, 0
      %p195 = por %p193, %p194
      %p196 = scmp.le.s32.totalorder 1, %s15
      %p197 = scmp.lt.s32.totalorder %s15, 4
      %p198 = pnand %p196, %p197
      %p199 = pneg %p198
      // Predicated region
      $region9: #{tpu_custom_call.1} parent=5 // pred_check
        _
      $region10: #{tpu_custom_call.1} parent=5 // pred_check_branch
        %201 = sbr.rel (%p198) target = $region12
      $region11: #{tpu_custom_call.1} parent=5 // pred_region
        %s202 = ssub.s32 %s15, 1
        // Predicated region
        $region13: #{tpu_custom_call.1} parent=11 // pred_check
          %p203 = pneg %p78
        $region14: #{tpu_custom_call.1} parent=11 // pred_check_branch
          %205 = sbr.rel (%p203) target = $region16
        $region15: #{tpu_custom_call.1} parent=11 // pred_region
          _
        $region16: #{tpu_custom_call.1} parent=11 // pred_fallthru
          _
        // Predicated region
        $region17: #{tpu_custom_call.1} parent=11 // pred_check
          %p206 = pneg %p99
        $region18: #{tpu_custom_call.1} parent=11 // pred_check_branch
          %208 = sbr.rel (%p206) target = $region20
        $region19: #{tpu_custom_call.1} parent=11 // pred_region
          _
        $region20: #{tpu_custom_call.1} parent=11 // pred_fallthru
          _
        // Predicated region
        $region21: #{tpu_custom_call.1} parent=11 // pred_check
          %p209 = pneg %p120
        $region22: #{tpu_custom_call.1} parent=11 // pred_check_branch
          %211 = sbr.rel (%p209) target = $region24
        $region23: #{tpu_custom_call.1} parent=11 // pred_region
          _
        $region24: #{tpu_custom_call.1} parent=11 // pred_fallthru
          _
        // Predicated region
        $region25: #{tpu_custom_call.1} parent=11 // pred_check
          %p212 = pneg %p141
        $region26: #{tpu_custom_call.1} parent=11 // pred_check_branch
          %214 = sbr.rel (%p212) target = $region28
        $region27: #{tpu_custom_call.1} parent=11 // pred_region
          _
        $region28: #{tpu_custom_call.1} parent=11 // pred_fallthru
          _
        // Predicated region
        $region29: #{tpu_custom_call.1} parent=11 // pred_check
          %p215 = pneg %p162
        $region30: #{tpu_custom_call.1} parent=11 // pred_check_branch
          %217 = sbr.rel (%p215) target = $region32
        $region31: #{tpu_custom_call.1} parent=11 // pred_region
          _
        $region32: #{tpu_custom_call.1} parent=11 // pred_fallthru
          _
      $region12: #{tpu_custom_call.1} parent=5 // pred_fallthru
        _
      %p218 = scmp.lt.s32.totalorder %s15, 3
      // Predicated region
      $region33: #{tpu_custom_call.1} parent=5 // pred_check
        %p219 = pneg %p218
      $region34: #{tpu_custom_call.1} parent=5 // pred_check_branch
        %221 = sbr.rel (%p219) target = $region36
      $region35: #{tpu_custom_call.1} parent=5 // pred_region
        // Predicated region
        $region37: #{tpu_custom_call.1} parent=35 // pred_check
          %p222 = pneg %p51
        $region38: #{tpu_custom_call.1} parent=35 // pred_check_branch
          %224 = sbr.rel (%p222) target = $region40
        $region39: #{tpu_custom_call.1} parent=35 // pred_region
          %p225 = scmp.eq.s32.totalorder %s22, 0
          %s226 = scalar_select %p225, %s23, 0
          %p227 = scmp.lt.s32.totalorder %s226, 0
          %s228 = scalar_select %p227, %s226, 0
          %s229 = smul.addr %s228, 8
          %s230 = scalar_lea.vmem %s0, %s229
          %p231 = scmp.eq.s32.totalorder %s22, 0
          %s232 = scalar_select %p231, %s23, 0
        $region40: #{tpu_custom_call.1} parent=35 // pred_fallthru
          _
      $region36: #{tpu_custom_call.1} parent=5 // pred_fallthru
        _
      %p233 = scmp.le.s32.totalorder 1, %s15
      %p234 = scmp.lt.s32.totalorder %s15, 4
      %p235 = pnand %p233, %p234
      %p236 = pneg %p235
      // Predicated region
      $region41: #{tpu_custom_call.1} parent=5 // pred_check
        _
      $region42: #{tpu_custom_call.1} parent=5 // pred_check_branch
        %238 = sbr.rel (%p235) target = $region44
      $region43: #{tpu_custom_call.1} parent=5 // pred_region
        %s239 = ssub.s32 %s15, 1
        %p240 = scmp.eq.s32.totalorder %s24, 0
        %s241 = scalar_select %p240, %s25, 0
        %p242 = scmp.lt.s32.totalorder %s241, 0
        %s243 = scalar_select %p242, %s241, 0
        %s244 = smul.addr %s243, 8
        %s245 = scalar_lea.vmem %s0, %s244
        %p246 = pneg %p57
        %p247 = pneg %p54
        %p248 = pneg %p78
        %p249 = pneg %p75
        %p250 = pneg %p99
        %p251 = pneg %p96
        %p252 = pneg %p120
        %p253 = pneg %p117
        %p254 = pneg %p141
        %p255 = pneg %p138
        %p256 = pneg %p162
        %p257 = pneg %p159
        %p258 = pneg %p188
        %p259 = pneg %p185
        %p260 = scmp.eq.s32.totalorder %s24, 0
        %s261 = scalar_select %p260, %s25, 0
        %p262 = scmp.lt.s32.totalorder %s261, 0
        %s263 = scalar_select %p262, %s261, 0
        %s264 = smul.addr %s263, 8
        %s265 = scalar_lea.vmem %s0, %s264
        %p266 = scmp.eq.s32.totalorder %s24, 0
        %s267 = scalar_select %p266, %s25, 0
        %p268 = scmp.eq.s32.totalorder %s24, 0
        %p269 = scmp.eq.s32.totalorder %s25, 0
        %p270 = pnand %p268, %p269
        %p271 = pneg %p270
        // Predicated region
        $region45: #{tpu_custom_call.1} parent=43 // pred_check
          _
        $region46: #{tpu_custom_call.1} parent=43 // pred_check_branch
          %273 = sbr.rel (%p270) target = $region48
        $region47: #{tpu_custom_call.1} parent=43 // pred_region
          %vm274 = vcmask 516096
          %275 = vst.msk [vmem:[#allocation2] sm:$0x1] %vm274, 0.0
          %276 = vst.msk [vmem:[#allocation3] sm:$0x1] %vm274, 0.0
          %vm277 = vcmask 253952
          %278 = vst.msk [vmem:[#allocation4] sm:$0x1] %vm277, 0.0
          %279 = vst.msk [vmem:[#allocation5] sm:$0x1] %vm277, 0.0
        $region48: #{tpu_custom_call.1} parent=43 // pred_fallthru
          _
        // Predicated region
        $region49: #{tpu_custom_call.1} parent=43 // pred_check
          %p280 = pneg %p268
        $region50: #{tpu_custom_call.1} parent=43 // pred_check_branch
          %282 = sbr.rel (%p280) target = $region52
        $region51: #{tpu_custom_call.1} parent=43 // pred_region
          %v283 = vld [vmem:[%s265] sm:$0xff]
          %v284 = vld [vmem:[%s1] sm:$0xff]
          %v285 = vld [vmem:[%s1 + $0x8] sm:$0xff]
          %vm286 = vcmask 130048
          %v288 = vsel %vm286, %v283, 0
          %290 = vmatprep.subr.mxu0 0.0
          %291 = vmatpush1.msra.mxu0 %v284
          %292 = vmatprep.subr.mxu0 0.0
          %293 = vmatpush1.msra.mxu0 %v285
          %294 = vmatprep.subr.mxu0 0.0
          %295 = vmatpush1.msra.mxu0 0.0
          %296 = vmatprep.subr.mxu0 0.0
          %297 = vmatpush1.msra.mxu0 0.0
          %298 = vmatprep.subr.mxu0 0.0
          %299 = vmatpush1.msra.mxu0 0.0
          %300 = vmatprep.subr.mxu0 0.0
          %301 = vmatpush1.msra.mxu0 0.0
          %302 = vmatprep.subr.mxu0 0.0
          %303 = vmatpush1.msra.mxu0 0.0
          %304 = vmatprep.subr.mxu0 0.0
          %305 = vmatpush1.msra.mxu0 0.0
          %306 = vmatprep.subr.mxu0 0.0
          %307 = vmatpush1.msra.mxu0 0.0
          %308 = vmatprep.subr.mxu0 0.0
          %309 = vmatpush1.msra.mxu0 0.0
          %310 = vmatprep.subr.mxu0 0.0
          %311 = vmatpush1.msra.mxu0 0.0
          %312 = vmatprep.subr.mxu0 0.0
          %313 = vmatpush1.msra.mxu0 0.0
          %314 = vmatprep.subr.mxu0 0.0
          %315 = vmatpush1.msra.mxu0 0.0
          %316 = vmatprep.subr.mxu0 0.0
          %317 = vmatpush1.msra.mxu0 0.0
          %318 = vmatprep.subr.mxu0 0.0
          %319 = vmatpush1.msra.mxu0 0.0
          %320 = vmatprep.subr.mxu0 0.0
          %321 = vmatpush1.msra.mxu0 0.0
          %322 = vmatprep.subr.mxu0 0.0
          %323 = vmatpush1.msra.mxu0 0.0
          %324 = vmatprep.subr.mxu0 0.0
          %325 = vmatpush1.msra.mxu0 0.0
          %326 = vmatprep.subr.mxu0 0.0
          %327 = vmatpush1.msra.mxu0 0.0
          %328 = vmatprep.subr.mxu0 0.0
          %329 = vmatpush1.msra.mxu0 0.0
          %330 = vmatprep.subr.mxu0 0.0
          %331 = vmatpush1.msra.mxu0 0.0
          %332 = vmatprep.subr.mxu0 0.0
          %333 = vmatpush1.msra.mxu0 0.0
          %334 = vmatprep.subr.mxu0 0.0
          %335 = vmatpush1.msra.mxu0 0.0
          %336 = vmatprep.subr.mxu0 0.0
          %337 = vmatpush1.msra.mxu0 0.0
          %338 = vmatprep.subr.mxu0 0.0
          %339 = vmatpush1.msra.mxu0 0.0
          %340 = vmatprep.subr.mxu0 0.0
          %341 = vmatpush1.msra.mxu0 0.0
          %342 = vmatprep.subr.mxu0 0.0
          %343 = vmatpush1.msra.mxu0 0.0
          %344 = vmatprep.subr.mxu0 0.0
          %345 = vmatpush1.msra.mxu0 0.0
          %346 = vmatprep.subr.mxu0 0.0
          %347 = vmatpush1.msra.mxu0 0.0
          %348 = vmatprep.subr.mxu0 0.0
          %349 = vmatpush1.msra.mxu0 0.0
          %350 = vmatprep.subr.mxu0 0.0
          %351 = vmatpush1.msra.mxu0 0.0
          %352 = vmatprep.subr.mxu0 0.0
          %353 = vmatpush1.msra.mxu0 0.0
          %354 = vmatprep.mubr.f32.mxu0 0.0
          %355 = vmatmul.mubr.f32.gmra.mrb[0].mxu0 %v288
          %v356 = vpop.f32.mrb[0].mxu0
          %v357 = vadd.f32 0.0, %v356
          %v358 = vpop.f32.mrb[0].mxu0
          %359 = vdwg.mxu0
          %s360 = smul.u32 %s25, 8
          %s361 = scalar_lea.vmem [#allocation6], %s360
          %vm362 = vcmask 523264
          %363 = vst.msk [vmem:[%s361] sm:$0xff] %vm362, %v357
          %v364 = vld [vmem:[#allocation2] sm:$0x1]
          %v365 = vsel %vm362, %v357, 0.0
          %v366 = vrot.slane %v365, 4
          %v367 = vadd.f32 %v365, %v366
          %v368 = vrot.slane %v367, 2
          %v369 = vadd.f32 %v367, %v368
          %v370 = vrot.slane %v369, 1
          %v371 = vadd.f32 %v369, %v370
          %v372 = vadd.f32 %v364, %v371
          %vm373 = vcmask 516096
          %374 = vst.msk [vmem:[#allocation2] sm:$0x1] %vm373, %v372
          %v375 = vld [vmem:[#allocation3] sm:$0x1]
          %v376 = vmul.f32 %v357, %v357
          %v377 = vsel %vm362, %v376, 0.0
          %v378 = vrot.slane %v377, 4
          %v379 = vadd.f32 %v377, %v378
          %v380 = vrot.slane %v379, 2
          %v381 = vadd.f32 %v379, %v380
          %v382 = vrot.slane %v381, 1
          %v383 = vadd.f32 %v381, %v382
          %v384 = vadd.f32 %v375, %v383
          %385 = vst.msk [vmem:[#allocation3] sm:$0x1] %vm373, %v384
          %vm386 = vcmask 57344
          %387 = vst.msk [vmem:[#allocation8] sm:$0x1] %vm386, 0.0
        $region52: #{tpu_custom_call.1} parent=43 // pred_fallthru
          _
        %p388 = scmp.eq.s32.totalorder %s24, 1
        // Predicated region
        $region53: #{tpu_custom_call.1} parent=43 // pred_check
          %p389 = pneg %p388
        $region54: #{tpu_custom_call.1} parent=43 // pred_check_branch
          %391 = sbr.rel (%p389) target = $region56
        $region55: #{tpu_custom_call.1} parent=43 // pred_region
          %s392 = smul.u32 %s25, 8
          %s393 = scalar_lea.vmem [#allocation6], %s392
          %v394 = vld [vmem:[%s393] sm:$0xff]
          %v395 = vld [vmem:[#allocation2] sm:$0x1]
          %v396 = vld [vmem:[#allocation3] sm:$0x1]
          %v397 = vld [vmem:[%s4] sm:$0x1]
          %v398 = vld [vmem:[%s4 + $0x1] sm:$0x1]
          %v399 = vmul.f32 %v395, 0.125
          %v400 = vmul.f32 %v396, 0.125
          %v401 = vmul.f32 %v399, %v399
          %v402 = vsub.f32 %v400, %v401
          %v403 = vmax.f32 %v402, 0.0
          %v404 = vadd.f32 %v403, 1e-05
          %v405 = vrsqrt.pop %v404
          %v406 = vmul.f32 %v397, %v405
          %v407 = vmul.f32 %v399, %v406
          %v408 = vsub.f32 %v398, %v407
          %v409 = vlaneseq
          %v410 = vshrl.u32 %v409, 7
          %v411 = vsub.s32 0, %v410
          %v412 = vrot.slane %v406, %v411
          %v413 = vmul.f32 %v394, %v412
          %v414 = vlaneseq
          %v415 = vshrl.u32 %v414, 7
          %v416 = vsub.s32 0, %v415
          %v417 = vrot.slane %v408, %v416
          %v418 = vadd.f32 %v413, %v417
          %v419 = vmax.f32 %v418, 0.0
          %v420 = vld [vmem:[%s2] sm:$0xff]
          %v421 = vld [vmem:[%s2 + $0x8] sm:$0xff]
          %v422 = vld [vmem:[%s2 + $0x10] sm:$0xff]
          %v423 = vld [vmem:[%s2 + $0x18] sm:$0xff]
          %v424 = vld [vmem:[%s2 + $0x20] sm:$0xff]
          %v425 = vld [vmem:[%s2 + $0x28] sm:$0xff]
          %v426 = vld [vmem:[%s2 + $0x30] sm:$0xff]
          %v427 = vld [vmem:[%s2 + $0x38] sm:$0xff]
          %vm428 = vcmask 523264
          %v430 = vsel %vm428, %v419, 0
          %432 = vmatprep.subr.mxu0 0.0
          %433 = vmatpush1.msra.mxu0 %v420
          %434 = vmatprep.subr.mxu0 0.0
          %435 = vmatpush1.msra.mxu0 %v421
          %436 = vmatprep.subr.mxu0 0.0
          %437 = vmatpush1.msra.mxu0 %v422
          %438 = vmatprep.subr.mxu0 0.0
          %439 = vmatpush1.msra.mxu0 %v423
          %440 = vmatprep.subr.mxu0 0.0
          %441 = vmatpush1.msra.mxu0 %v424
          %442 = vmatprep.subr.mxu0 0.0
          %443 = vmatpush1.msra.mxu0 %v425
          %444 = vmatprep.subr.mxu0 0.0
          %445 = vmatpush1.msra.mxu0 %v426
          %446 = vmatprep.subr.mxu0 0.0
          %447 = vmatpush1.msra.mxu0 %v427
          %448 = vmatprep.subr.mxu0 0.0
          %449 = vmatpush1.msra.mxu0 0.0
          %450 = vmatprep.subr.mxu0 0.0
          %451 = vmatpush1.msra.mxu0 0.0
          %452 = vmatprep.subr.mxu0 0.0
          %453 = vmatpush1.msra.mxu0 0.0
          %454 = vmatprep.subr.mxu0 0.0
          %455 = vmatpush1.msra.mxu0 0.0
          %456 = vmatprep.subr.mxu0 0.0
          %457 = vmatpush1.msra.mxu0 0.0
          %458 = vmatprep.subr.mxu0 0.0
          %459 = vmatpush1.msra.mxu0 0.0
          %460 = vmatprep.subr.mxu0 0.0
          %461 = vmatpush1.msra.mxu0 0.0
          %462 = vmatprep.subr.mxu0 0.0
          %463 = vmatpush1.msra.mxu0 0.0
          %464 = vmatprep.subr.mxu0 0.0
          %465 = vmatpush1.msra.mxu0 0.0
          %466 = vmatprep.subr.mxu0 0.0
          %467 = vmatpush1.msra.mxu0 0.0
          %468 = vmatprep.subr.mxu0 0.0
          %469 = vmatpush1.msra.mxu0 0.0
          %470 = vmatprep.subr.mxu0 0.0
          %471 = vmatpush1.msra.mxu0 0.0
          %472 = vmatprep.subr.mxu0 0.0
          %473 = vmatpush1.msra.mxu0 0.0
          %474 = vmatprep.subr.mxu0 0.0
          %475 = vmatpush1.msra.mxu0 0.0
          %476 = vmatprep.subr.mxu0 0.0
          %477 = vmatpush1.msra.mxu0 0.0
          %478 = vmatprep.subr.mxu0 0.0
          %479 = vmatpush1.msra.mxu0 0.0
          %480 = vmatprep.subr.mxu0 0.0
          %481 = vmatpush1.msra.mxu0 0.0
          %482 = vmatprep.subr.mxu0 0.0
          %483 = vmatpush1.msra.mxu0 0.0
          %484 = vmatprep.subr.mxu0 0.0
          %485 = vmatpush1.msra.mxu0 0.0
          %486 = vmatprep.subr.mxu0 0.0
          %487 = vmatpush1.msra.mxu0 0.0
          %488 = vmatprep.subr.mxu0 0.0
          %489 = vmatpush1.msra.mxu0 0.0
          %490 = vmatprep.subr.mxu0 0.0
          %491 = vmatpush1.msra.mxu0 0.0
          %492 = vmatprep.subr.mxu0 0.0
          %493 = vmatpush1.msra.mxu0 0.0
          %494 = vmatprep.subr.mxu0 0.0
          %495 = vmatpush1.msra.mxu0 0.0
          %496 = vmatprep.mubr.f32.mxu0 0.0
          %497 = vmatmul.mubr.f32.gmra.mrb[0].mxu0 %v430
          %v498 = vpop.f32.mrb[0].mxu0
          %v499 = vadd.f32 0.0, %v498
          %v500 = vpop.f32.mrb[0].mxu0
          %501 = vdwg.mxu0
          %v502 = vld [vmem:[#allocation4] sm:$0x1]
          %vm503 = vcmask 261120
          %v504 = vsel %vm503, %v499, 0.0
          %v505 = vrot.slane %v504, 4
          %v506 = vadd.f32 %v504, %v505
          %v507 = vrot.slane %v506, 2
          %v508 = vadd.f32 %v506, %v507
          %v509 = vrot.slane %v508, 1
          %v510 = vadd.f32 %v508, %v509
          %v511 = vadd.f32 %v502, %v510
          %vm512 = vcmask 253952
          %513 = vst.msk [vmem:[#allocation4] sm:$0x1] %vm512, %v511
          %v514 = vld [vmem:[#allocation5] sm:$0x1]
          %v515 = vmul.f32 %v499, %v499
          %v516 = vsel %vm503, %v515, 0.0
          %v517 = vrot.slane %v516, 4
          %v518 = vadd.f32 %v516, %v517
          %v519 = vrot.slane %v518, 2
          %v520 = vadd.f32 %v518, %v519
          %v521 = vrot.slane %v520, 1
          %v522 = vadd.f32 %v520, %v521
          %v523 = vadd.f32 %v514, %v522
          %524 = vst.msk [vmem:[#allocation5] sm:$0x1] %vm512, %v523
          %vm525 = vcmask 57344
          %526 = vst.msk [vmem:[#allocation8] sm:$0x1] %vm525, 0.0
        $region56: #{tpu_custom_call.1} parent=43 // pred_fallthru
          _
        %p527 = scmp.eq.s32.totalorder %s24, 2
        // Predicated region
        $region57: #{tpu_custom_call.1} parent=43 // pred_check
          %p528 = pneg %p527
        $region58: #{tpu_custom_call.1} parent=43 // pred_check_branch
          %530 = sbr.rel (%p528) target = $region60
        $region59: #{tpu_custom_call.1} parent=43 // pred_region
          %s531 = smul.u32 %s25, 8
          %s532 = scalar_lea.vmem [#allocation6], %s531
          %v533 = vld [vmem:[%s532] sm:$0xff]
          %v534 = vld [vmem:[#allocation2] sm:$0x1]
          %v535 = vld [vmem:[#allocation3] sm:$0x1]
          %v536 = vld [vmem:[%s4] sm:$0x1]
          %v537 = vld [vmem:[%s4 + $0x1] sm:$0x1]
          %v538 = vmul.f32 %v534, 0.125
          %v539 = vmul.f32 %v535, 0.125
          %v540 = vmul.f32 %v538, %v538
          %v541 = vsub.f32 %v539, %v540
          %v542 = vmax.f32 %v541, 0.0
          %v543 = vadd.f32 %v542, 1e-05
          %v544 = vrsqrt.pop %v543
          %v545 = vmul.f32 %v536, %v544
          %v546 = vmul.f32 %v538, %v545
          %v547 = vsub.f32 %v537, %v546
          %v548 = vlaneseq
          %v549 = vshrl.u32 %v548, 7
          %v550 = vsub.s32 0, %v549
          %v551 = vrot.slane %v545, %v550
          %v552 = vmul.f32 %v533, %v551
          %v553 = vlaneseq
          %v554 = vshrl.u32 %v553, 7
          %v555 = vsub.s32 0, %v554
          %v556 = vrot.slane %v547, %v555
          %v557 = vadd.f32 %v552, %v556
          %v558 = vmax.f32 %v557, 0.0
          %v559 = vld [vmem:[%s2] sm:$0xff]
          %v560 = vld [vmem:[%s2 + $0x8] sm:$0xff]
          %v561 = vld [vmem:[%s2 + $0x10] sm:$0xff]
          %v562 = vld [vmem:[%s2 + $0x18] sm:$0xff]
          %v563 = vld [vmem:[%s2 + $0x20] sm:$0xff]
          %v564 = vld [vmem:[%s2 + $0x28] sm:$0xff]
          %v565 = vld [vmem:[%s2 + $0x30] sm:$0xff]
          %v566 = vld [vmem:[%s2 + $0x38] sm:$0xff]
          %vm567 = vcmask 523264
          %v569 = vsel %vm567, %v558, 0
          %571 = vmatprep.subr.mxu0 0.0
          %572 = vmatpush1.msra.mxu0 %v559
          %573 = vmatprep.subr.mxu0 0.0
          %574 = vmatpush1.msra.mxu0 %v560
          %575 = vmatprep.subr.mxu0 0.0
          %576 = vmatpush1.msra.mxu0 %v561
          %577 = vmatprep.subr.mxu0 0.0
          %578 = vmatpush1.msra.mxu0 %v562
          %579 = vmatprep.subr.mxu0 0.0
          %580 = vmatpush1.msra.mxu0 %v563
          %581 = vmatprep.subr.mxu0 0.0
          %582 = vmatpush1.msra.mxu0 %v564
          %583 = vmatprep.subr.mxu0 0.0
          %584 = vmatpush1.msra.mxu0 %v565
          %585 = vmatprep.subr.mxu0 0.0
          %586 = vmatpush1.msra.mxu0 %v566
          %587 = vmatprep.subr.mxu0 0.0
          %588 = vmatpush1.msra.mxu0 0.0
          %589 = vmatprep.subr.mxu0 0.0
          %590 = vmatpush1.msra.mxu0 0.0
          %591 = vmatprep.subr.mxu0 0.0
          %592 = vmatpush1.msra.mxu0 0.0
          %593 = vmatprep.subr.mxu0 0.0
          %594 = vmatpush1.msra.mxu0 0.0
          %595 = vmatprep.subr.mxu0 0.0
          %596 = vmatpush1.msra.mxu0 0.0
          %597 = vmatprep.subr.mxu0 0.0
          %598 = vmatpush1.msra.mxu0 0.0
          %599 = vmatprep.subr.mxu0 0.0
          %600 = vmatpush1.msra.mxu0 0.0
          %601 = vmatprep.subr.mxu0 0.0
          %602 = vmatpush1.msra.mxu0 0.0
          %603 = vmatprep.subr.mxu0 0.0
          %604 = vmatpush1.msra.mxu0 0.0
          %605 = vmatprep.subr.mxu0 0.0
          %606 = vmatpush1.msra.mxu0 0.0
          %607 = vmatprep.subr.mxu0 0.0
          %608 = vmatpush1.msra.mxu0 0.0
          %609 = vmatprep.subr.mxu0 0.0
          %610 = vmatpush1.msra.mxu0 0.0
          %611 = vmatprep.subr.mxu0 0.0
          %612 = vmatpush1.msra.mxu0 0.0
          %613 = vmatprep.subr.mxu0 0.0
          %614 = vmatpush1.msra.mxu0 0.0
          %615 = vmatprep.subr.mxu0 0.0
          %616 = vmatpush1.msra.mxu0 0.0
          %617 = vmatprep.subr.mxu0 0.0
          %618 = vmatpush1.msra.mxu0 0.0
          %619 = vmatprep.subr.mxu0 0.0
          %620 = vmatpush1.msra.mxu0 0.0
          %621 = vmatprep.subr.mxu0 0.0
          %622 = vmatpush1.msra.mxu0 0.0
          %623 = vmatprep.subr.mxu0 0.0
          %624 = vmatpush1.msra.mxu0 0.0
          %625 = vmatprep.subr.mxu0 0.0
          %626 = vmatpush1.msra.mxu0 0.0
          %627 = vmatprep.subr.mxu0 0.0
          %628 = vmatpush1.msra.mxu0 0.0
          %629 = vmatprep.subr.mxu0 0.0
          %630 = vmatpush1.msra.mxu0 0.0
          %631 = vmatprep.subr.mxu0 0.0
          %632 = vmatpush1.msra.mxu0 0.0
          %633 = vmatprep.subr.mxu0 0.0
          %634 = vmatpush1.msra.mxu0 0.0
          %635 = vmatprep.mubr.f32.mxu0 0.0
          %636 = vmatmul.mubr.f32.gmra.mrb[0].mxu0 %v569
          %v637 = vpop.f32.mrb[0].mxu0
          %v638 = vadd.f32 0.0, %v637
          %v639 = vpop.f32.mrb[0].mxu0
          %640 = vdwg.mxu0
          %v641 = vld [vmem:[#allocation4] sm:$0x1]
          %v642 = vld [vmem:[#allocation5] sm:$0x1]
          %v643 = vld [vmem:[%s4 + $0x2] sm:$0x1]
          %v644 = vld [vmem:[%s4 + $0x3] sm:$0x1]
          %v645 = vmul.f32 %v641, 0.125
          %v646 = vmul.f32 %v642, 0.125
          %v647 = vmul.f32 %v645, %v645
          %v648 = vsub.f32 %v646, %v647
          %v649 = vmax.f32 %v648, 0.0
          %v650 = vadd.f32 %v649, 1e-05
          %v651 = vrsqrt.pop %v650
          %v652 = vmul.f32 %v643, %v651
          %v653 = vmul.f32 %v645, %v652
          %v654 = vsub.f32 %v644, %v653
          %v655 = vlaneseq
          %v656 = vshrl.u32 %v655, 7
          %v657 = vsub.s32 0, %v656
          %v658 = vrot.slane %v652, %v657
          %v659 = vmul.f32 %v638, %v658
          %v660 = vlaneseq
          %v661 = vshrl.u32 %v660, 7
          %v662 = vsub.s32 0, %v661
          %v663 = vrot.slane %v654, %v662
          %v664 = vadd.f32 %v659, %v663
          %v665 = vmax.f32 %v664, 0.0
          %v666 = vld [vmem:[%s3] sm:$0x1]
          %v667 = vld [vmem:[#allocation7] sm:$0x1]
          %669 = vset.pattern.permute.xlu0 0
          %670 = vperm.xlu0 %669, %v667
          %v671 = vpop.permute.xlu0 %670
          %v673 = vlaneseq
          %v674 = vshrl.u32 %v673, 7
          %v675 = vsub.s32 0, %v674
          %v676 = vrot.slane %v671, %v675
          %vm677 = vcmask 261120
          %v679 = vsel %vm677, %v666, 0
          %v682 = vsel %vm677, %v665, 0
          %684 = vmatprep.subr.mxu0 0.0
          %685 = vmatpush1.xpose.msra.mxu0 %v682
          %686 = vmatprep.subr.mxu0 0.0
          %687 = vmatpush1.xpose.msra.mxu0 0.0
          %688 = vmatprep.subr.mxu0 0.0
          %689 = vmatpush1.xpose.msra.mxu0 0.0
          %690 = vmatprep.subr.mxu0 0.0
          %691 = vmatpush1.xpose.msra.mxu0 0.0
          %692 = vmatprep.subr.mxu0 0.0
          %693 = vmatpush1.xpose.msra.mxu0 0.0
          %694 = vmatprep.subr.mxu0 0.0
          %695 = vmatpush1.xpose.msra.mxu0 0.0
          %696 = vmatprep.subr.mxu0 0.0
          %697 = vmatpush1.xpose.msra.mxu0 0.0
          %698 = vmatprep.subr.mxu0 0.0
          %699 = vmatpush1.xpose.msra.mxu0 0.0
          %700 = vmatprep.subr.mxu0 0.0
          %701 = vmatpush1.xpose.msra.mxu0 0.0
          %702 = vmatprep.subr.mxu0 0.0
          %703 = vmatpush1.xpose.msra.mxu0 0.0
          %704 = vmatprep.subr.mxu0 0.0
          %705 = vmatpush1.xpose.msra.mxu0 0.0
          %706 = vmatprep.subr.mxu0 0.0
          %707 = vmatpush1.xpose.msra.mxu0 0.0
          %708 = vmatprep.subr.mxu0 0.0
          %709 = vmatpush1.xpose.msra.mxu0 0.0
          %710 = vmatprep.subr.mxu0 0.0
          %711 = vmatpush1.xpose.msra.mxu0 0.0
          %712 = vmatprep.subr.mxu0 0.0
          %713 = vmatpush1.xpose.msra.mxu0 0.0
          %714 = vmatprep.subr.mxu0 0.0
          %715 = vmatpush1.xpose.msra.mxu0 0.0
          %716 = vmatprep.subr.mxu0 0.0
          %717 = vmatpush1.xpose.msra.mxu0 0.0
          %718 = vmatprep.subr.mxu0 0.0
          %719 = vmatpush1.xpose.msra.mxu0 0.0
          %720 = vmatprep.subr.mxu0 0.0
          %721 = vmatpush1.xpose.msra.mxu0 0.0
          %722 = vmatprep.subr.mxu0 0.0
          %723 = vmatpush1.xpose.msra.mxu0 0.0
          %724 = vmatprep.subr.mxu0 0.0
          %725 = vmatpush1.xpose.msra.mxu0 0.0
          %726 = vmatprep.subr.mxu0 0.0
          %727 = vmatpush1.xpose.msra.mxu0 0.0
          %728 = vmatprep.subr.mxu0 0.0
          %729 = vmatpush1.xpose.msra.mxu0 0.0
          %730 = vmatprep.subr.mxu0 0.0
          %731 = vmatpush1.xpose.msra.mxu0 0.0
          %732 = vmatprep.subr.mxu0 0.0
          %733 = vmatpush1.xpose.msra.mxu0 0.0
          %734 = vmatprep.subr.mxu0 0.0
          %735 = vmatpush1.xpose.msra.mxu0 0.0
          %736 = vmatprep.subr.mxu0 0.0
          %737 = vmatpush1.xpose.msra.mxu0 0.0
          %738 = vmatprep.subr.mxu0 0.0
          %739 = vmatpush1.xpose.msra.mxu0 0.0
          %740 = vmatprep.subr.mxu0 0.0
          %741 = vmatpush1.xpose.msra.mxu0 0.0
          %742 = vmatprep.subr.mxu0 0.0
          %743 = vmatpush1.xpose.msra.mxu0 0.0
          %744 = vmatprep.subr.mxu0 0.0
          %745 = vmatpush1.xpose.msra.mxu0 0.0
          %746 = vmatprep.subr.mxu0 0.0
          %747 = vmatpush1.xpose.msra.mxu0 0.0
          %748 = vmatprep.mubr.f32.mxu0 0.0
          %749 = vmatmul.mubr.f32.gmra.mrb[0].mxu0 %v679
          %v750 = vpop.f32.mrb[0].mxu0
          %v751 = vadd.f32 %v676, %v750
          %v752 = vpop.f32.mrb[0].mxu0
          %753 = vdwg.mxu0
          %vm754 = vcmask 57344
          %755 = vst.msk [vmem:[#allocation8] sm:$0x1] %vm754, %v751
        $region60: #{tpu_custom_call.1} parent=43 // pred_fallthru
          _
        // Predicated region
        $region61: #{tpu_custom_call.1} parent=43 // pred_check
          %p756 = pneg %p185
        $region62: #{tpu_custom_call.1} parent=43 // pred_check_branch
          %758 = sbr.rel (%p756) target = $region64
        $region63: #{tpu_custom_call.1} parent=43 // pred_region
          %s760 = ssub.s32 16, 16
          %761 = vsyncadd [#allocation9], %s760
          %s762 = smul.addr %s25, 16
          %s763 = scalar_lea.hbm %s6, %s762
          %s765 = sshll.u32 [#allocation8], 4
          %s766 = int_to_ptr.vmem [resolvable:$true] %s765
          %768 = dma.vmem_to_hbm [thread:$0]  %s766, 16, %s763, [#allocation9]
        $region64: #{tpu_custom_call.1} parent=43 // pred_fallthru
          _
        // Predicated region
        $region65: #{tpu_custom_call.1} parent=43 // pred_check
          %p769 = pneg %p185
        $region66: #{tpu_custom_call.1} parent=43 // pred_check_branch
          %771 = sbr.rel (%p769) target = $region68
        $region67: #{tpu_custom_call.1} parent=43 // pred_region
          %772 = dma.done [#allocation9], 16
        $region68: #{tpu_custom_call.1} parent=43 // pred_fallthru
          _
      $region44: #{tpu_custom_call.1} parent=5 // pred_fallthru
        _
      %p773 = scmp.le.s32.totalorder 2, %s15
      // Predicated region
      $region69: #{tpu_custom_call.1} parent=5 // pred_check
        %p774 = pneg %p773
      $region70: #{tpu_custom_call.1} parent=5 // pred_check_branch
        %776 = sbr.rel (%p774) target = $region72
      $region71: #{tpu_custom_call.1} parent=5 // pred_region
        %s777 = ssub.s32 %s15, 2
      $region72: #{tpu_custom_call.1} parent=5 // pred_fallthru
        _
    $region6: #{tpu_custom_call.1} parent=1 // loop_footer
      %s19 = sadd.s32 1, %s15
    $region7: #{tpu_custom_call.1} parent=1 // loop_footer_branch
      %14 = sbr.rel target = $region3
    $region8: #{tpu_custom_call.1} parent=1 // loop_exit
      _
    %778 = vsyncpa [#allocation9], 1
    %s779 = scalar_lea.sflag [#allocation9], 1
    %780 = vsyncpa %s779, 1

</llo_original>
